<compile_context>
chip_gen: v6e
topology: v6e:2x2x1
jax: 0.10.0
libtpu: 0.0.40
codegen_flags: <defaults>
</compile_context>

<pallas_src>
import jax
import jax.numpy as jnp
from jax.experimental import pallas as pl
from jax.experimental.pallas import tpu as pltpu

K1 = 4           # layer-1 kernel size: 1x1 -> 4x4
K2 = 4           # layer-2 kernel size == stride: 4x4 -> 16x16 (non-overlapping)
IMG = K1 * K2    # output image side (16)
HW = IMG * IMG   # flattened output pixels (256) -- lane-dense (2 x 128)


def _round_up(v, m):
    return (v + m - 1) // m * m


def _decoder_kernel(x_ref, w1_ref, b1_ref, w2_ref, b2_ref, o_ref):
    """One row-block of (sample, timestep) latents -> decoded 16x16 images.

    x_ref : (TM, F)       bf16 latent rows (rows = flattened (b, t))
    w1_ref: (F, H1*16)    bf16 ConvTranspose2d #1 as a dense matrix (VMEM resident)
    b1_ref: (1, H1*16)    f32 bias #1, repeated per spatial position
    w2_ref: (H1*16, 256)  bf16 ConvTranspose2d #2 as a dense matrix (VMEM resident)
    b2_ref: (1, 256)      f32 bias #2 broadcast over pixels
    o_ref : (TM, 256)     sigmoid(decoder(x)), flattened image per row
    """
    # bf16 x bf16 -> f32 accumulation on the MXU.
    h = jnp.dot(x_ref[...], w1_ref[...], preferred_element_type=jnp.float32)
    h = jnp.maximum(h + b1_ref[...], 0.0)                          # bias + ReLU (f32, VPU)
    y = jnp.dot(h.astype(jnp.bfloat16), w2_ref[...],
                preferred_element_type=jnp.float32)
    y = y + b2_ref[...]
    o_ref[...] = jax.nn.sigmoid(y).astype(o_ref.dtype)             # fused sigmoid (EUP)


def prepare_decoder_params(w1, b1, w2, b2):
    """One-time weight preprocessing (hoist out of the forward hot path).

    w1: (F, H1, 4, 4); b1: (H1,); w2: (H1, 1, 4, 4); b2: (1,)."""
    F, H1 = w1.shape[0], w1.shape[1]

    # Layer 1 on a 1x1 spatial input is a pure dense map F -> (H1, 4, 4).
    w1_mat = w1.reshape(F, H1 * K1 * K1).astype(jnp.bfloat16)            # (F, H1*16)
    b1_vec = jnp.repeat(b1, K1 * K1).reshape(1, H1 * K1 * K1)
    b1_vec = b1_vec.astype(jnp.float32)                                  # (1, H1*16)

    # Layer 2 (kernel == stride == 4, no overlap): output block (i, j) of the
    # 16x16 image is  sum_c h[c, i, j] * w2[c, 0].  Expand to one dense
    # (H1*16, 256) matrix so the whole decoder is two MXU matmuls in-kernel.
    eye = jnp.eye(K1, dtype=jnp.float32)
    w2_big = jnp.einsum('cde,ia,jb->cijadbe', w2[:, 0].astype(jnp.float32), eye, eye)
    w2_big = w2_big.reshape(H1 * K1 * K1, HW).astype(jnp.bfloat16)       # (H1*16, 256)
    b2_vec = jnp.full((1, HW), b2[0], dtype=jnp.float32)                 # (1, 256)

    return w1_mat, b1_vec, w2_big, b2_vec


def trajectory_cnn2d_decoder_forward(x, params, out_dtype=jnp.float32):
    """x: (B, F, T) f32; params from prepare_decoder_params().

    Returns sigmoid(decoder(x_t)) stacked over t, with PyTorch .squeeze()
    semantics applied: (B, T, 16, 16) for B > 1, T > 1."""
    w1_mat, b1_vec, w2_big, b2_vec = params
    B, F, T = x.shape
    N1 = w1_mat.shape[1]                                          # H1 * 16

    # Flatten (b, t) into rows, cast matmul operand to bf16.
    x2d = jnp.transpose(x, (0, 2, 1)).reshape(B * T, F).astype(jnp.bfloat16)
    M = B * T

    # --- row tile: as large as possible, MXU-row aligned, >= 2 grid steps ----
    TM = min(1024, _round_up(M, 8))
    if TM >= 128:
        TM = _round_up(TM, 128)                                   # fill MXU rows
    M_pad = _round_up(M, TM)
    if M_pad // TM < 2:
        # guarantee >=2 grid steps so v7x's second TensorCore gets work
        # (dimension_semantics=("parallel",) shards the row axis across cores)
        TM = max(8, _round_up(pl.cdiv(M_pad, 2), 8))
        M_pad = _round_up(M, TM)
    if M_pad != M:
        x2d = jnp.pad(x2d, ((0, M_pad - M), (0, 0)))

    out2d = pl.pallas_call(
        _decoder_kernel,
        out_shape=jax.ShapeDtypeStruct((M_pad, HW), out_dtype),
        grid=(M_pad // TM,),
        in_specs=[
            pl.BlockSpec((TM, F), lambda i: (i, 0)),              # latent rows (bf16)
            # weights/biases: full-array blocks, resident in VMEM across steps
            pl.BlockSpec((F, N1), lambda i: (0, 0)),
            pl.BlockSpec((1, N1), lambda i: (0, 0)),
            pl.BlockSpec((N1, HW), lambda i: (0, 0)),
            pl.BlockSpec((1, HW), lambda i: (0, 0)),
        ],
        out_specs=pl.BlockSpec((TM, HW), lambda i: (i, 0)),       # lane-dense output
        compiler_params=pltpu.CompilerParams(
            dimension_semantics=("parallel",),                    # rows independent
            vmem_limit_bytes=32 * 1024 * 1024),
    )(x2d, w1_mat, b1_vec, w2_big, b2_vec)

    # stack(dim=2) -> (B, 1, T, 16, 16), then PyTorch-style .squeeze()
    out = out2d[:M].reshape(B, 1, T, IMG, IMG)
    return jnp.squeeze(out)


def _reference(x, w1, b1, w2, b2):
    """Pure-JAX (f32) mirror of the PyTorch per-timestep loop."""
    B, F, T = x.shape
    outs = []
    for t in range(T):
        z = x[:, :, t]                                            # (B, F)
        h = jnp.einsum('bf,fcij->bcij', z, w1) + b1[None, :, None, None]
        h = jnp.maximum(h, 0.0)                                   # (B, H1, 4, 4)
        y = jnp.einsum('bcij,cde->bidje', h, w2[:, 0])            # (B,4,4,4,4)
        y = y.reshape(B, IMG, IMG) + b2[0]
        outs.append(y[:, None])                                   # (B, 1, 16, 16)
    out = jnp.stack(outs, 2)                                      # (B, 1, T, 16, 16)
    out = jnp.squeeze(out)
    return jax.nn.sigmoid(out)


if __name__ == "__main__":
    batch = 2
    feature_size = 16
    seq_len = 8
    hidden = 32

    key = jax.random.PRNGKey(0)
    kx, k1, k2, k3, k4 = jax.random.split(key, 5)
    x = jax.random.normal(kx, (batch, feature_size, seq_len), dtype=jnp.float32)
    w1 = 0.1 * jax.random.normal(k1, (feature_size, hidden, K1, K1), dtype=jnp.float32)
    b1 = 0.1 * jax.random.normal(k2, (hidden,), dtype=jnp.float32)
    w2 = 0.1 * jax.random.normal(k3, (hidden, 1, K2, K2), dtype=jnp.float32)
    b2 = 0.1 * jax.random.normal(k4, (1,), dtype=jnp.float32)

    params = prepare_decoder_params(w1, b1, w2, b2)               # one-time prep
    out = trajectory_cnn2d_decoder_forward(x, params)
    out = jax.block_until_ready(out)

    ref = _reference(x, w1, b1, w2, b2)
    assert out.shape == ref.shape, (out.shape, ref.shape)
    # bf16 matmuls vs f32 reference: loosened tolerance (post-sigmoid).
    max_err = float(jnp.max(jnp.abs(out - ref)))
    assert max_err < 2e-2, max_err

    print("KERNEL_OK")
</pallas_src>

<mosaic_0001>
module attributes {stable_mosaic.version = 11 : i64} {
  func.func @_decoder_kernel(%arg0: i32, %arg1: memref<8x16xbf16, #tpu.memory_space<vmem>>, %arg2: memref<16x512xbf16, #tpu.memory_space<vmem>>, %arg3: memref<1x512xf32, #tpu.memory_space<vmem>>, %arg4: memref<512x256xbf16, #tpu.memory_space<vmem>>, %arg5: memref<1x256xf32, #tpu.memory_space<vmem>>, %arg6: memref<8x256xf32, #tpu.memory_space<vmem>>) attributes {dimension_semantics = [#tpu.dimension_semantics<parallel>], iteration_bounds = array<i64: 2>, scalar_prefetch = 0 : i64, scratch_operands = 0 : i64, tpu.core_type = #tpu.core_type<tc>, window_params = [{transform_indices = @transform_0, window_bounds = array<i64: 8, 16>}, {pipeline_mode = #tpu.pipeline_mode<synchronous>, transform_indices = @transform_1, window_bounds = array<i64: 16, 512>}, {pipeline_mode = #tpu.pipeline_mode<synchronous>, transform_indices = @transform_2, window_bounds = array<i64: 1, 512>}, {pipeline_mode = #tpu.pipeline_mode<synchronous>, transform_indices = @transform_3, window_bounds = array<i64: 512, 256>}, {pipeline_mode = #tpu.pipeline_mode<synchronous>, transform_indices = @transform_4, window_bounds = array<i64: 1, 256>}, {transform_indices = @transform_5, window_bounds = array<i64: 8, 256>}]} {
    %c0 = arith.constant 0 : index
    %c0_0 = arith.constant 0 : index
    %0 = vector.load %arg1[%c0, %c0_0] : memref<8x16xbf16, #tpu.memory_space<vmem>>, vector<8x16xbf16>
    %c0_1 = arith.constant 0 : index
    %c0_2 = arith.constant 0 : index
    %1 = vector.load %arg2[%c0_1, %c0_2] : memref<16x512xbf16, #tpu.memory_space<vmem>>, vector<16x512xbf16>
    %cst = arith.constant dense<0.000000e+00> : vector<8x512xf32>
    %2 = tpu.matmul %0, %1, %cst {dimension_numbers = #tpu.dot_dimension_numbers<[1], [0], [0], [1], [0, 0, 1, 1], [], []>} : vector<8x16xbf16>, vector<16x512xbf16>, vector<8x512xf32> -> vector<8x512xf32>
    %c0_3 = arith.constant 0 : index
    %c0_4 = arith.constant 0 : index
    %3 = vector.load %arg3[%c0_3, %c0_4] : memref<1x512xf32, #tpu.memory_space<vmem>>, vector<1x512xf32>
    %4 = vector.broadcast %3 : vector<1x512xf32> to vector<8x512xf32>
    %5 = arith.addf %2, %4 : vector<8x512xf32>
    %cst_5 = arith.constant 0.000000e+00 : f32
    %6 = vector.broadcast %cst_5 : f32 to vector<8x512xf32>
    %7 = arith.maximumf %5, %6 : vector<8x512xf32>
    %8 = arith.truncf %7 : vector<8x512xf32> to vector<8x512xbf16>
    %c0_6 = arith.constant 0 : index
    %c0_7 = arith.constant 0 : index
    %9 = vector.load %arg4[%c0_6, %c0_7] : memref<512x256xbf16, #tpu.memory_space<vmem>>, vector<512x256xbf16>
    %cst_8 = arith.constant dense<0.000000e+00> : vector<8x256xf32>
    %10 = tpu.matmul %8, %9, %cst_8 {dimension_numbers = #tpu.dot_dimension_numbers<[1], [0], [0], [1], [0, 0, 1, 1], [], []>} : vector<8x512xbf16>, vector<512x256xbf16>, vector<8x256xf32> -> vector<8x256xf32>
    %c0_9 = arith.constant 0 : index
    %c0_10 = arith.constant 0 : index
    %11 = vector.load %arg5[%c0_9, %c0_10] : memref<1x256xf32, #tpu.memory_space<vmem>>, vector<1x256xf32>
    %12 = vector.broadcast %11 : vector<1x256xf32> to vector<8x256xf32>
    %13 = arith.addf %10, %12 : vector<8x256xf32>
    %14 = arith.negf %13 : vector<8x256xf32>
    %15 = math.exp %14 : vector<8x256xf32>
    %cst_11 = arith.constant 1.000000e+00 : f32
    %16 = vector.broadcast %cst_11 : f32 to vector<8x256xf32>
    %17 = arith.addf %16, %15 : vector<8x256xf32>
    %18 = arith.divf %16, %17 : vector<8x256xf32>
    %c0_12 = arith.constant 0 : index
    %c0_13 = arith.constant 0 : index
    %19 = vector.load %arg6[%c0_12, %c0_13] : memref<8x256xf32, #tpu.memory_space<vmem>>, vector<8x256xf32>
    tpu.vector_store %arg6[%c0_12, %c0_13], %18 {strides = array<i32>} : memref<8x256xf32, #tpu.memory_space<vmem>>, vector<8x256xf32>,
    return
  }
  func.func @transform_0(%arg0: i32) -> (i32, i32) {
    %c0_i32 = arith.constant 0 : i32
    %c0_i32_0 = arith.constant 0 : i32
    return %arg0, %c0_i32 : i32, i32
  }
  func.func @transform_1(%arg0: i32) -> (i32, i32) {
    %c0_i32 = arith.constant 0 : i32
    %c0_i32_0 = arith.constant 0 : i32
    %c0_i32_1 = arith.constant 0 : i32
    return %c0_i32, %c0_i32_0 : i32, i32
  }
  func.func @transform_2(%arg0: i32) -> (i32, i32) {
    %c0_i32 = arith.constant 0 : i32
    %c0_i32_0 = arith.constant 0 : i32
    %c0_i32_1 = arith.constant 0 : i32
    return %c0_i32, %c0_i32_0 : i32, i32
  }
  func.func @transform_3(%arg0: i32) -> (i32, i32) {
    %c0_i32 = arith.constant 0 : i32
    %c0_i32_0 = arith.constant 0 : i32
    %c0_i32_1 = arith.constant 0 : i32
    return %c0_i32, %c0_i32_0 : i32, i32
  }
  func.func @transform_4(%arg0: i32) -> (i32, i32) {
    %c0_i32 = arith.constant 0 : i32
    %c0_i32_0 = arith.constant 0 : i32
    %c0_i32_1 = arith.constant 0 : i32
    return %c0_i32, %c0_i32_0 : i32, i32
  }
  func.func @transform_5(%arg0: i32) -> (i32, i32) {
    %c0_i32 = arith.constant 0 : i32
    %c0_i32_0 = arith.constant 0 : i32
    return %arg0, %c0_i32 : i32, i32
  }
}

</mosaic_0001>

<llo_original>
// kernel: tpu_custom_call.1
$region0: #{tpu_custom_call.1}
  #allocation0 [shape = 'u32[]', space=smem, size = 0x4, offset = 0x4, fixed_abs, tag = 'smem constant byte address 0x4 - core index']
  #allocation1 [shape = 'u32[144,128]{1,0:T(1,128)}', space=vmem, size = 0x12000, scoped, tag = 'internal scratch']
  %s0 = inlined_call_operand.hbm [shape: bf16[16,16], index: 0, kind: input, shape index: {}]
  %s1 = inlined_call_operand.hbm [shape: bf16[16,512], index: 1, kind: input, shape index: {}]
  %s2 = inlined_call_operand.hbm [shape: f32[1,512], index: 2, kind: input, shape index: {}]
  %s3 = inlined_call_operand.hbm [shape: bf16[512,256], index: 3, kind: input, shape index: {}]
  %s4 = inlined_call_operand.vmem [shape: f32[1,256], index: 4, kind: input, shape index: {}]
  %s5 = inlined_call_operand.hbm [shape: f32[16,256], index: 5, kind: output, shape index: {}]
  %s6 = sld [smem:[#allocation0]]
  $region69: #{tpu_custom_call.1} parent=0
    _
  %s8 = ssub.s32 1, %s6
  %s9 = scalar_select 0, %s8, %s6
  $region1: #{tpu_custom_call.1} parent=0
    #allocation2 [shape = 'u8[4096]{0}', space=vmem, size = 0x1000, scoped, tag = 'input window, operand 0']
    #allocation3 [shape = 's32[2]{0}', space=sflag, size = 0x8, scoped, tag = 'scoped memory for tpu_custom_call.1']
    #allocation4 [shape = 's32[2]{0}', space=sflag, size = 0x8, scoped, tag = 'scoped memory for tpu_custom_call.1']
    #allocation5 [shape = 'u8[16384]{0}', space=vmem, size = 0x4000, scoped, tag = 'input window, operand 1, single buffered']
    #allocation6 [shape = 's32[1]{0}', space=sflag, size = 0x4, scoped, tag = 'scoped memory for tpu_custom_call.1']
    #allocation7 [shape = 'u8[2048]{0}', space=vmem, size = 0x800, scoped, tag = 'input window, operand 2, single buffered']
    #allocation8 [shape = 'u8[262144]{0}', space=vmem, size = 0x40000, scoped, tag = 'input window, operand 3, single buffered']
    #allocation9 [shape = 's32[1]{0}', space=sflag, size = 0x4, scoped, tag = 'scoped memory for tpu_custom_call.1']
    #allocation10 [shape = 'u8[16384]{0}', space=vmem, size = 0x4000, scoped, tag = 'output window, operand 0']
    %10 = vsyncpa [#allocation3], 0
    %s11 = scalar_lea.sflag [#allocation3], 1
    %12 = vsyncpa %s11, 0
    %13 = vsyncpa [#allocation6], 0
    %14 = vsyncpa [#allocation9], 0
    %15 = vsyncpa [#allocation4], 0
    %s16 = scalar_lea.sflag [#allocation4], 1
    %17 = vsyncpa %s16, 0
    loop: start=0, step=1, limit=4
    $region2: #{tpu_custom_call.1} parent=1 // loop_pre_header
      _
    $region3: #{tpu_custom_call.1} parent=1 // loop_header
      %s19 = sphi 0, %s23
      %p20 = scmp.ge.s32.totalorder %s19, 4
      %s29 = sphi 0, %s31
      %s32 = sphi 0, %s29
      %s33 = sphi 0, %s32
      %s49 = sphi 0, %s33
      %s53 = sphi 0, %s53
      %s55 = sphi 0, %s53
      %s56 = sphi 0, %s55
      %s70 = sphi 0, %s56
      %s74 = sphi 0, %s74
      %s76 = sphi 0, %s74
      %s77 = sphi 0, %s76
      %s91 = sphi 0, %s77
      %s95 = sphi 0, %s95
      %s97 = sphi 0, %s95
      %s98 = sphi 0, %s97
      %s112 = sphi 0, %s98
      %s116 = sphi 0, %s116
      %s118 = sphi 0, %s116
      %s119 = sphi 0, %s118
      %s133 = sphi 0, %s119
      %s139 = sphi 0, %s141
      %s142 = sphi 0, %s139
      %s143 = sphi 0, %s142
      %s159 = sphi 0, %s143
    $region4: #{tpu_custom_call.1} parent=1 // loop_header_branch
      %22 = sbr.rel (%p20) target = $region8
    $region5: #{tpu_custom_call.1} parent=1 // loop_body
      %s24 = ssub.s32 %s19, 1
      %s25 = ssub.s32 %s19, 2
      %s26 = sadd.s32 %s19, 1
      %s27 = ssub.s32 %s19, %s26
      %p28 = scmp.eq.s32.totalorder %s27, 0
      %s30 = sadd.s32 %s29, 1
      %s31 = scalar_select %p28, %s29, %s30
      %p34 = pneg %p28
      %p35 = scmp.eq.s32.totalorder %s19, 1
      %p36 = por %p34, %p35
      %p37 = scmp.ne.s32.totalorder %s29, %s32
      %p38 = scmp.eq.s32.totalorder %s19, 0
      %p39 = por %p37, %p38
      %p40 = scmp.ne.s32.totalorder %s29, %s32
      %p41 = scmp.eq.s32.totalorder %s24, 1
      %p42 = por %p40, %p41
      %p43 = scmp.ne.s32.totalorder %s32, %s33
      %p44 = scmp.eq.s32.totalorder %s24, 0
      %p45 = por %p43, %p44
      %p46 = scmp.ne.s32.totalorder %s32, %s33
      %p47 = scmp.eq.s32.totalorder %s25, 1
      %p48 = por %p46, %p47
      %p50 = scmp.ne.s32.totalorder %s33, %s49
      %p51 = scmp.eq.s32.totalorder %s25, 0
      %p52 = por %p50, %p51
      %s54 = sadd.s32 %s53, 1
      %p57 = scmp.eq.s32.totalorder %s19, 1
      %p58 = scmp.ne.s32.totalorder %s53, %s55
      %p59 = scmp.eq.s32.totalorder %s19, 0
      %p60 = por %p58, %p59
      %p61 = scmp.ne.s32.totalorder %s53, %s55
      %p62 = scmp.eq.s32.totalorder %s24, 1
      %p63 = por %p61, %p62
      %p64 = scmp.ne.s32.totalorder %s55, %s56
      %p65 = scmp.eq.s32.totalorder %s24, 0
      %p66 = por %p64, %p65
      %p67 = scmp.ne.s32.totalorder %s55, %s56
      %p68 = scmp.eq.s32.totalorder %s25, 1
      %p69 = por %p67, %p68
      %p71 = scmp.ne.s32.totalorder %s56, %s70
      %p72 = scmp.eq.s32.totalorder %s25, 0
      %p73 = por %p71, %p72
      %s75 = sadd.s32 %s74, 1
      %p78 = scmp.eq.s32.totalorder %s19, 1
      %p79 = scmp.ne.s32.totalorder %s74, %s76
      %p80 = scmp.eq.s32.totalorder %s19, 0
      %p81 = por %p79, %p80
      %p82 = scmp.ne.s32.totalorder %s74, %s76
      %p83 = scmp.eq.s32.totalorder %s24, 1
      %p84 = por %p82, %p83
      %p85 = scmp.ne.s32.totalorder %s76, %s77
      %p86 = scmp.eq.s32.totalorder %s24, 0
      %p87 = por %p85, %p86
      %p88 = scmp.ne.s32.totalorder %s76, %s77
      %p89 = scmp.eq.s32.totalorder %s25, 1
      %p90 = por %p88, %p89
      %p92 = scmp.ne.s32.totalorder %s77, %s91
      %p93 = scmp.eq.s32.totalorder %s25, 0
      %p94 = por %p92, %p93
      %s96 = sadd.s32 %s95, 1
      %p99 = scmp.eq.s32.totalorder %s19, 1
      %p100 = scmp.ne.s32.totalorder %s95, %s97
      %p101 = scmp.eq.s32.totalorder %s19, 0
      %p102 = por %p100, %p101
      %p103 = scmp.ne.s32.totalorder %s95, %s97
      %p104 = scmp.eq.s32.totalorder %s24, 1
      %p105 = por %p103, %p104
      %p106 = scmp.ne.s32.totalorder %s97, %s98
      %p107 = scmp.eq.s32.totalorder %s24, 0
      %p108 = por %p106, %p107
      %p109 = scmp.ne.s32.totalorder %s97, %s98
      %p110 = scmp.eq.s32.totalorder %s25, 1
      %p111 = por %p109, %p110
      %p113 = scmp.ne.s32.totalorder %s98, %s112
      %p114 = scmp.eq.s32.totalorder %s25, 0
      %p115 = por %p113, %p114
      %s117 = sadd.s32 %s116, 1
      %p120 = scmp.eq.s32.totalorder %s19, 1
      %p121 = scmp.ne.s32.totalorder %s116, %s118
      %p122 = scmp.eq.s32.totalorder %s19, 0
      %p123 = por %p121, %p122
      %p124 = scmp.ne.s32.totalorder %s116, %s118
      %p125 = scmp.eq.s32.totalorder %s24, 1
      %p126 = por %p124, %p125
      %p127 = scmp.ne.s32.totalorder %s118, %s119
      %p128 = scmp.eq.s32.totalorder %s24, 0
      %p129 = por %p127, %p128
      %p130 = scmp.ne.s32.totalorder %s118, %s119
      %p131 = scmp.eq.s32.totalorder %s25, 1
      %p132 = por %p130, %p131
      %p134 = scmp.ne.s32.totalorder %s119, %s133
      %p135 = scmp.eq.s32.totalorder %s25, 0
      %p136 = por %p134, %p135
      %s137 = ssub.s32 %s19, %s26
      %p138 = scmp.eq.s32.totalorder %s137, 0
      %s140 = sadd.s32 %s139, 1
      %s141 = scalar_select %p138, %s139, %s140
      %p144 = pneg %p138
      %p145 = scmp.eq.s32.totalorder %s19, 1
      %p146 = por %p144, %p145
      %p147 = scmp.ne.s32.totalorder %s139, %s142
      %p148 = scmp.eq.s32.totalorder %s19, 0
      %p149 = por %p147, %p148
      %p150 = scmp.ne.s32.totalorder %s139, %s142
      %p151 = scmp.eq.s32.totalorder %s24, 1
      %p152 = por %p150, %p151
      %p153 = scmp.ne.s32.totalorder %s142, %s143
      %p154 = scmp.eq.s32.totalorder %s24, 0
      %p155 = por %p153, %p154
      %p156 = scmp.ne.s32.totalorder %s142, %s143
      %p157 = scmp.eq.s32.totalorder %s25, 1
      %p158 = por %p156, %p157
      %p160 = scmp.ne.s32.totalorder %s143, %s159
      %p161 = scmp.eq.s32.totalorder %s25, 0
      %p162 = por %p160, %p161
      %p163 = scmp.le.s32.totalorder 1, %s19
      %p164 = scmp.lt.s32.totalorder %s19, 3
      %p165 = pnand %p163, %p164
      %p166 = pneg %p165
      // Predicated region
      $region9: #{tpu_custom_call.1} parent=5 // pred_check
        _
      $region10: #{tpu_custom_call.1} parent=5 // pred_check_branch
        %168 = sbr.rel (%p165) target = $region12
      $region11: #{tpu_custom_call.1} parent=5 // pred_region
        %s169 = ssub.s32 %s19, 1
        // Predicated region
        $region13: #{tpu_custom_call.1} parent=11 // pred_check
          %p170 = pneg %p66
        $region14: #{tpu_custom_call.1} parent=11 // pred_check_branch
          %172 = sbr.rel (%p170) target = $region16
        $region15: #{tpu_custom_call.1} parent=11 // pred_region
          %s174 = ssub.s32 512, 512
          %175 = vsyncadd [#allocation6], %s174
          %s176 = sshll.u32 [#allocation5], 4
          %s177 = int_to_ptr.vmem [resolvable:$true] %s176
          %182 = dma.hbm_to_vmem [thread:$0]  %s1, 512, %s177, [#allocation6], 256, 256, 16
        $region16: #{tpu_custom_call.1} parent=11 // pred_fallthru
          _
        // Predicated region
        $region17: #{tpu_custom_call.1} parent=11 // pred_check
          %p183 = pneg %p87
        $region18: #{tpu_custom_call.1} parent=11 // pred_check_branch
          %185 = sbr.rel (%p183) target = $region20
        $region19: #{tpu_custom_call.1} parent=11 // pred_region
          %s187 = ssub.s32 64, 64
          %188 = vsyncadd [#allocation6], %s187
          %s190 = sshll.u32 [#allocation7], 4
          %s191 = int_to_ptr.vmem [resolvable:$true] %s190
          %193 = dma.hbm_to_vmem [thread:$0]  %s2, 64, %s191, [#allocation6]
        $region20: #{tpu_custom_call.1} parent=11 // pred_fallthru
          _
        // Predicated region
        $region21: #{tpu_custom_call.1} parent=11 // pred_check
          %p194 = pneg %p108
        $region22: #{tpu_custom_call.1} parent=11 // pred_check_branch
          %196 = sbr.rel (%p194) target = $region24
        $region23: #{tpu_custom_call.1} parent=11 // pred_region
          %s198 = ssub.s32 8192, 8192
          %199 = vsyncadd [#allocation9], %s198
          %s200 = sshll.u32 [#allocation8], 4
          %s201 = int_to_ptr.vmem [resolvable:$true] %s200
          %206 = dma.hbm_to_vmem [thread:$0]  %s3, 8192, %s201, [#allocation9], 128, 128, 8
        $region24: #{tpu_custom_call.1} parent=11 // pred_fallthru
          _
        // Predicated region
        $region25: #{tpu_custom_call.1} parent=11 // pred_check
          %p207 = pneg %p129
        $region26: #{tpu_custom_call.1} parent=11 // pred_check_branch
          %209 = sbr.rel (%p207) target = $region28
        $region27: #{tpu_custom_call.1} parent=11 // pred_region
          _
        $region28: #{tpu_custom_call.1} parent=11 // pred_fallthru
          _
      $region12: #{tpu_custom_call.1} parent=5 // pred_fallthru
        _
      %p210 = scmp.lt.s32.totalorder %s19, 2
      // Predicated region
      $region29: #{tpu_custom_call.1} parent=5 // pred_check
        %p211 = pneg %p210
      $region30: #{tpu_custom_call.1} parent=5 // pred_check_branch
        %213 = sbr.rel (%p211) target = $region32
      $region31: #{tpu_custom_call.1} parent=5 // pred_region
        // Predicated region
        $region33: #{tpu_custom_call.1} parent=31 // pred_check
          %p214 = pneg %p39
        $region34: #{tpu_custom_call.1} parent=31 // pred_check_branch
          %216 = sbr.rel (%p214) target = $region36
        $region35: #{tpu_custom_call.1} parent=31 // pred_region
          %s217 = sand.u32 %s29, 1
          %s218 = scalar_lea.sflag [#allocation3], %s217
          %s219 = sand.u32 %s29, 1
          %s220 = smul.addr %s219, 4
          %s221 = scalar_lea.vmem [#allocation2], %s220
          %s223 = ssub.s32 64, 64
          %224 = vsyncadd %s218, %s223
          %s225 = smul.addr %s19, 64
          %s226 = scalar_lea.hbm %s0, %s225
          %s228 = sshll.u32 %s221, 4
          %s229 = int_to_ptr.vmem [resolvable:$true] %s228
          %231 = dma.hbm_to_vmem [thread:$0]  %s226, 64, %s229, %s218
        $region36: #{tpu_custom_call.1} parent=31 // pred_fallthru
          _
      $region32: #{tpu_custom_call.1} parent=5 // pred_fallthru
        _
      %p232 = scmp.le.s32.totalorder 1, %s19
      %p233 = scmp.lt.s32.totalorder %s19, 3
      %p234 = pnand %p232, %p233
      %p235 = pneg %p234
      // Predicated region
      $region37: #{tpu_custom_call.1} parent=5 // pred_check
        _
      $region38: #{tpu_custom_call.1} parent=5 // pred_check_branch
        %237 = sbr.rel (%p234) target = $region40
      $region39: #{tpu_custom_call.1} parent=5 // pred_region
        %s238 = ssub.s32 %s19, 1
        %s239 = sand.u32 %s32, 1
        %s240 = scalar_lea.sflag [#allocation3], %s239
        %s241 = sand.u32 %s32, 1
        %s242 = smul.addr %s241, 4
        %s243 = scalar_lea.vmem [#allocation2], %s242
        // Predicated region
        $region41: #{tpu_custom_call.1} parent=39 // pred_check
          %p244 = pneg %p45
        $region42: #{tpu_custom_call.1} parent=39 // pred_check_branch
          %246 = sbr.rel (%p244) target = $region44
        $region43: #{tpu_custom_call.1} parent=39 // pred_region
          %247 = dma.done %s240, 64
        $region44: #{tpu_custom_call.1} parent=39 // pred_fallthru
          _
        // Predicated region
        $region45: #{tpu_custom_call.1} parent=39 // pred_check
          %p248 = pneg %p66
        $region46: #{tpu_custom_call.1} parent=39 // pred_check_branch
          %250 = sbr.rel (%p248) target = $region48
        $region47: #{tpu_custom_call.1} parent=39 // pred_region
          %251 = dma.done [#allocation6], 512
        $region48: #{tpu_custom_call.1} parent=39 // pred_fallthru
          _
        // Predicated region
        $region49: #{tpu_custom_call.1} parent=39 // pred_check
          %p252 = pneg %p87
        $region50: #{tpu_custom_call.1} parent=39 // pred_check_branch
          %254 = sbr.rel (%p252) target = $region52
        $region51: #{tpu_custom_call.1} parent=39 // pred_region
          %255 = dma.done [#allocation6], 64
        $region52: #{tpu_custom_call.1} parent=39 // pred_fallthru
          _
        // Predicated region
        $region53: #{tpu_custom_call.1} parent=39 // pred_check
          %p256 = pneg %p108
        $region54: #{tpu_custom_call.1} parent=39 // pred_check_branch
          %258 = sbr.rel (%p256) target = $region56
        $region55: #{tpu_custom_call.1} parent=39 // pred_region
          %259 = dma.done [#allocation9], 8192
        $region56: #{tpu_custom_call.1} parent=39 // pred_fallthru
          _
        %s260 = sand.u32 %s32, 1
        %s261 = scalar_lea.sflag [#allocation3], %s260
        %s262 = sand.u32 %s32, 1
        %s263 = smul.addr %s262, 4
        %s264 = scalar_lea.vmem [#allocation2], %s263
        %p265 = pneg %p45
        %p266 = pneg %p42
        %p267 = pneg %p66
        %p268 = pneg %p63
        %p269 = pneg %p87
        %p270 = pneg %p84
        %p271 = pneg %p108
        %p272 = pneg %p105
        %p273 = pneg %p129
        %p274 = pneg %p126
        %p275 = pneg %p155
        %p276 = pneg %p152
        %s277 = sand.u32 %s142, 1
        %s278 = scalar_lea.sflag [#allocation4], %s277
        %s279 = sand.u32 %s142, 1
        %s280 = smul.addr %s279, 16
        %s281 = scalar_lea.vmem [#allocation10], %s280
        %v283 = vld [vmem:[%s243] sm:$0xf]
        %v284 = vld [vmem:[#allocation5] sm:$0xff]
        %v285 = vld [vmem:[#allocation5 + $0x8] sm:$0xff]
        %v286 = vld [vmem:[#allocation5 + $0x10] sm:$0xff]
        %v287 = vld [vmem:[#allocation5 + $0x18] sm:$0xff]
        %v288 = vld [vmem:[#allocation7] sm:$0xf]
        %v290 = vlaneseq
        %v291 = vshrl.u32 %v290, 7
        %v292 = vsub.s32 0, %v291
        %v293 = vrot.slane %v288, %v292
        %v294 = vlaneseq
        %v295 = vshrl.u32 %v294, 7
        %v296 = vsub.s32 1, %v295
        %v297 = vrot.slane %v288, %v296
        %v298 = vlaneseq
        %v299 = vshrl.u32 %v298, 7
        %v300 = vsub.s32 2, %v299
        %v301 = vrot.slane %v288, %v300
        %v302 = vlaneseq
        %v303 = vshrl.u32 %v302, 7
        %v304 = vsub.s32 3, %v303
        %v305 = vrot.slane %v288, %v304
        %v314 = vunpack.c.l.b16 %v284
        %v315 = vunpack.c.h.b16 %v284
        %v316 = vunpack.c.l.b16 %v285
        %v317 = vunpack.c.h.b16 %v285
        %v318 = vunpack.c.l.b16 %v286
        %v319 = vunpack.c.h.b16 %v286
        %v320 = vunpack.c.l.b16 %v287
        %v321 = vunpack.c.h.b16 %v287
        %v322 = vpack.c.b16 %v318, %v314
        %v323 = vpack.c.b16 %v319, %v315
        %v324 = vpack.c.b16 %v320, %v316
        %v325 = vpack.c.b16 %v321, %v317
        %vm330 = vcmask 130048
        %v332 = vsel %vm330, %v283, 0
        %334 = vmatprep.subr.bf16.mxu0 0
        %335 = vmatpush1.bf16.msra.mxu0 0
        %336 = vmatprep.subr.bf16.mxu0 0
        %337 = vmatpush1.bf16.msra.mxu0 0
        %338 = vmatprep.subr.bf16.mxu0 0
        %339 = vmatpush1.bf16.msra.mxu0 0
        %340 = vmatprep.subr.bf16.mxu0 0
        %341 = vmatpush1.bf16.msra.mxu0 0
        %342 = vmatprep.subr.bf16.mxu0 0
        %343 = vmatpush1.bf16.msra.mxu0 0
        %344 = vmatprep.subr.bf16.mxu0 0
        %345 = vmatpush1.bf16.msra.mxu0 0
        %346 = vmatprep.subr.bf16.mxu0 0
        %347 = vmatpush1.bf16.msra.mxu0 0
        %348 = vmatprep.subr.bf16.mxu0 %v323
        %349 = vmatpush1.bf16.msra.mxu0 %v322
        %350 = vmatprep.subr.bf16.mxu0 0
        %351 = vmatpush2.bf16.msra.mxu0 0
        %352 = vmatprep.subr.bf16.mxu0 0
        %353 = vmatpush2.bf16.msra.mxu0 0
        %354 = vmatprep.subr.bf16.mxu0 0
        %355 = vmatpush2.bf16.msra.mxu0 0
        %356 = vmatprep.subr.bf16.mxu0 0
        %357 = vmatpush2.bf16.msra.mxu0 0
        %358 = vmatprep.subr.bf16.mxu0 0
        %359 = vmatpush2.bf16.msra.mxu0 0
        %360 = vmatprep.subr.bf16.mxu0 0
        %361 = vmatpush2.bf16.msra.mxu0 0
        %362 = vmatprep.subr.bf16.mxu0 0
        %363 = vmatpush2.bf16.msra.mxu0 0
        %364 = vmatprep.subr.bf16.mxu0 0
        %365 = vmatpush2.bf16.msra.mxu0 0
        %366 = vmatprep.mubr.bf16.mxu0 0
        %367 = vmatmul.mubr.bf16.gmra.mxu0 %v332
        %v368 = vpop.f32.mrf.mxu0
        %v369 = vadd.f32 %v293, %v368
        %v370 = vpop.f32.mrf.mxu0
        %v371 = vadd.f32 %v297, %v370
        %v372 = vpop.f32.mrf.mxu0
        %v373 = vpop.f32.mrf.mxu0
        %374 = vdwg.mxu0
        %375 = vmatprep.subr.bf16.mxu0 0
        %376 = vmatpush1.bf16.msra.mxu0 0
        %377 = vmatprep.subr.bf16.mxu0 0
        %378 = vmatpush1.bf16.msra.mxu0 0
        %379 = vmatprep.subr.bf16.mxu0 0
        %380 = vmatpush1.bf16.msra.mxu0 0
        %381 = vmatprep.subr.bf16.mxu0 0
        %382 = vmatpush1.bf16.msra.mxu0 0
        %383 = vmatprep.subr.bf16.mxu0 0
        %384 = vmatpush1.bf16.msra.mxu0 0
        %385 = vmatprep.subr.bf16.mxu0 0
        %386 = vmatpush1.bf16.msra.mxu0 0
        %387 = vmatprep.subr.bf16.mxu0 0
        %388 = vmatpush1.bf16.msra.mxu0 0
        %389 = vmatprep.subr.bf16.mxu0 %v325
        %390 = vmatpush1.bf16.msra.mxu0 %v324
        %391 = vmatprep.subr.bf16.mxu0 0
        %392 = vmatpush2.bf16.msra.mxu0 0
        %393 = vmatprep.subr.bf16.mxu0 0
        %394 = vmatpush2.bf16.msra.mxu0 0
        %395 = vmatprep.subr.bf16.mxu0 0
        %396 = vmatpush2.bf16.msra.mxu0 0
        %397 = vmatprep.subr.bf16.mxu0 0
        %398 = vmatpush2.bf16.msra.mxu0 0
        %399 = vmatprep.subr.bf16.mxu0 0
        %400 = vmatpush2.bf16.msra.mxu0 0
        %401 = vmatprep.subr.bf16.mxu0 0
        %402 = vmatpush2.bf16.msra.mxu0 0
        %403 = vmatprep.subr.bf16.mxu0 0
        %404 = vmatpush2.bf16.msra.mxu0 0
        %405 = vmatprep.subr.bf16.mxu0 0
        %406 = vmatpush2.bf16.msra.mxu0 0
        %407 = vmatprep.mubr.bf16.mxu0 0
        %408 = vmatmul.mubr.bf16.gmra.mxu0 %v332
        %v409 = vpop.f32.mrf.mxu0
        %v410 = vadd.f32 %v301, %v409
        %v411 = vpop.f32.mrf.mxu0
        %v412 = vadd.f32 %v305, %v411
        %v413 = vpop.f32.mrf.mxu0
        %v414 = vpop.f32.mrf.mxu0
        %415 = vdwg.mxu0
        %v416 = vmax.f32 %v369, 0.0
        %v417 = vmax.f32 %v371, 0.0
        %v418 = vmax.f32 %v410, 0.0
        %v419 = vmax.f32 %v412, 0.0
        %v420 = vpack.c.bf16 %v416, %v416
        %v421 = vpack.c.bf16 %v417, %v417
        %v422 = vpack.c.bf16 %v418, %v418
        %v423 = vpack.c.bf16 %v419, %v419
        %v424 = vld [vmem:[#allocation8] sm:$0xff]
        %v425 = vld [vmem:[#allocation8 + $0x8] sm:$0xff]
        %v426 = vld [vmem:[#allocation8 + $0x10] sm:$0xff]
        %v427 = vld [vmem:[#allocation8 + $0x18] sm:$0xff]
        %v428 = vld [vmem:[#allocation8 + $0x20] sm:$0xff]
        %v429 = vld [vmem:[#allocation8 + $0x28] sm:$0xff]
        %v430 = vld [vmem:[#allocation8 + $0x30] sm:$0xff]
        %v431 = vld [vmem:[#allocation8 + $0x38] sm:$0xff]
        %v432 = vld [vmem:[#allocation8 + $0x40] sm:$0xff]
        %v433 = vld [vmem:[#allocation8 + $0x48] sm:$0xff]
        %v434 = vld [vmem:[#allocation8 + $0x50] sm:$0xff]
        %v435 = vld [vmem:[#allocation8 + $0x58] sm:$0xff]
        %v436 = vld [vmem:[#allocation8 + $0x60] sm:$0xff]
        %v437 = vld [vmem:[#allocation8 + $0x68] sm:$0xff]
        %v438 = vld [vmem:[#allocation8 + $0x70] sm:$0xff]
        %v439 = vld [vmem:[#allocation8 + $0x78] sm:$0xff]
        %v440 = vld [vmem:[#allocation8 + $0x80] sm:$0xff]
        %v441 = vld [vmem:[#allocation8 + $0x88] sm:$0xff]
        %v442 = vld [vmem:[#allocation8 + $0x90] sm:$0xff]
        %v443 = vld [vmem:[#allocation8 + $0x98] sm:$0xff]
        %v444 = vld [vmem:[#allocation8 + $0xa0] sm:$0xff]
        %v445 = vld [vmem:[#allocation8 + $0xa8] sm:$0xff]
        %v446 = vld [vmem:[#allocation8 + $0xb0] sm:$0xff]
        %v447 = vld [vmem:[#allocation8 + $0xb8] sm:$0xff]
        %v448 = vld [vmem:[#allocation8 + $0xc0] sm:$0xff]
        %v449 = vld [vmem:[#allocation8 + $0xc8] sm:$0xff]
        %v450 = vld [vmem:[#allocation8 + $0xd0] sm:$0xff]
        %v451 = vld [vmem:[#allocation8 + $0xd8] sm:$0xff]
        %v452 = vld [vmem:[#allocation8 + $0xe0] sm:$0xff]
        %v453 = vld [vmem:[#allocation8 + $0xe8] sm:$0xff]
        %v454 = vld [vmem:[#allocation8 + $0xf0] sm:$0xff]
        %v455 = vld [vmem:[#allocation8 + $0xf8] sm:$0xff]
        %v456 = vld [vmem:[#allocation8 + $0x100] sm:$0xff]
        %v457 = vld [vmem:[#allocation8 + $0x108] sm:$0xff]
        %v458 = vld [vmem:[#allocation8 + $0x110] sm:$0xff]
        %v459 = vld [vmem:[#allocation8 + $0x118] sm:$0xff]
        %v460 = vld [vmem:[#allocation8 + $0x120] sm:$0xff]
        %v461 = vld [vmem:[#allocation8 + $0x128] sm:$0xff]
        %v462 = vld [vmem:[#allocation8 + $0x130] sm:$0xff]
        %v463 = vld [vmem:[#allocation8 + $0x138] sm:$0xff]
        %v464 = vld [vmem:[#allocation8 + $0x140] sm:$0xff]
        %v465 = vld [vmem:[#allocation8 + $0x148] sm:$0xff]
        %v466 = vld [vmem:[#allocation8 + $0x150] sm:$0xff]
        %v467 = vld [vmem:[#allocation8 + $0x158] sm:$0xff]
        %v468 = vld [vmem:[#allocation8 + $0x160] sm:$0xff]
        %v469 = vld [vmem:[#allocation8 + $0x168] sm:$0xff]
        %v470 = vld [vmem:[#allocation8 + $0x170] sm:$0xff]
        %v471 = vld [vmem:[#allocation8 + $0x178] sm:$0xff]
        %v472 = vld [vmem:[#allocation8 + $0x180] sm:$0xff]
        %v473 = vld [vmem:[#allocation8 + $0x188] sm:$0xff]
        %v474 = vld [vmem:[#allocation8 + $0x190] sm:$0xff]
        %v475 = vld [vmem:[#allocation8 + $0x198] sm:$0xff]
        %v476 = vld [vmem:[#allocation8 + $0x1a0] sm:$0xff]
        %v477 = vld [vmem:[#allocation8 + $0x1a8] sm:$0xff]
        %v478 = vld [vmem:[#allocation8 + $0x1b0] sm:$0xff]
        %v479 = vld [vmem:[#allocation8 + $0x1b8] sm:$0xff]
        %v480 = vld [vmem:[#allocation8 + $0x1c0] sm:$0xff]
        %v481 = vld [vmem:[#allocation8 + $0x1c8] sm:$0xff]
        %v482 = vld [vmem:[#allocation8 + $0x1d0] sm:$0xff]
        %v483 = vld [vmem:[#allocation8 + $0x1d8] sm:$0xff]
        %v484 = vld [vmem:[#allocation8 + $0x1e0] sm:$0xff]
        %v485 = vld [vmem:[#allocation8 + $0x1e8] sm:$0xff]
        %v486 = vld [vmem:[#allocation8 + $0x1f0] sm:$0xff]
        %v487 = vld [vmem:[#allocation8 + $0x1f8] sm:$0xff]
        %v488 = vld [vmem:[%s4] sm:$0x3]
        %v490 = vlaneseq
        %v491 = vshrl.u32 %v490, 7
        %v492 = vsub.s32 0, %v491
        %v493 = vrot.slane %v488, %v492
        %v494 = vlaneseq
        %v495 = vshrl.u32 %v494, 7
        %v496 = vsub.s32 1, %v495
        %v497 = vrot.slane %v488, %v496
        %v564 = vunpack.c.l.b16 %v424
        %v565 = vunpack.c.h.b16 %v424
        %v566 = vunpack.c.l.b16 %v425
        %v567 = vunpack.c.h.b16 %v425
        %v568 = vunpack.c.l.b16 %v426
        %v569 = vunpack.c.h.b16 %v426
        %v570 = vunpack.c.l.b16 %v427
        %v571 = vunpack.c.h.b16 %v427
        %v572 = vunpack.c.l.b16 %v428
        %v573 = vunpack.c.h.b16 %v428
        %v574 = vunpack.c.l.b16 %v429
        %v575 = vunpack.c.h.b16 %v429
        %v576 = vunpack.c.l.b16 %v430
        %v577 = vunpack.c.h.b16 %v430
        %v578 = vunpack.c.l.b16 %v431
        %v579 = vunpack.c.h.b16 %v431
        %v580 = vunpack.c.l.b16 %v432
        %v581 = vunpack.c.h.b16 %v432
        %v582 = vunpack.c.l.b16 %v433
        %v583 = vunpack.c.h.b16 %v433
        %v584 = vunpack.c.l.b16 %v434
        %v585 = vunpack.c.h.b16 %v434
        %v586 = vunpack.c.l.b16 %v435
        %v587 = vunpack.c.h.b16 %v435
        %v588 = vunpack.c.l.b16 %v436
        %v589 = vunpack.c.h.b16 %v436
        %v590 = vunpack.c.l.b16 %v437
        %v591 = vunpack.c.h.b16 %v437
        %v592 = vunpack.c.l.b16 %v438
        %v593 = vunpack.c.h.b16 %v438
        %v594 = vunpack.c.l.b16 %v439
        %v595 = vunpack.c.h.b16 %v439
        %v596 = vunpack.c.l.b16 %v440
        %v597 = vunpack.c.h.b16 %v440
        %v598 = vunpack.c.l.b16 %v441
        %v599 = vunpack.c.h.b16 %v441
        %v600 = vunpack.c.l.b16 %v442
        %v601 = vunpack.c.h.b16 %v442
        %v602 = vunpack.c.l.b16 %v443
        %v603 = vunpack.c.h.b16 %v443
        %v604 = vunpack.c.l.b16 %v444
        %v605 = vunpack.c.h.b16 %v444
        %v606 = vunpack.c.l.b16 %v445
        %v607 = vunpack.c.h.b16 %v445
        %v608 = vunpack.c.l.b16 %v446
        %v609 = vunpack.c.h.b16 %v446
        %v610 = vunpack.c.l.b16 %v447
        %v611 = vunpack.c.h.b16 %v447
        %v612 = vunpack.c.l.b16 %v448
        %v613 = vunpack.c.h.b16 %v448
        %v614 = vunpack.c.l.b16 %v449
        %v615 = vunpack.c.h.b16 %v449
        %v616 = vunpack.c.l.b16 %v450
        %v617 = vunpack.c.h.b16 %v450
        %v618 = vunpack.c.l.b16 %v451
        %v619 = vunpack.c.h.b16 %v451
        %v620 = vunpack.c.l.b16 %v452
        %v621 = vunpack.c.h.b16 %v452
        %v622 = vunpack.c.l.b16 %v453
        %v623 = vunpack.c.h.b16 %v453
        %v624 = vunpack.c.l.b16 %v454
        %v625 = vunpack.c.h.b16 %v454
        %v626 = vunpack.c.l.b16 %v455
        %v627 = vunpack.c.h.b16 %v455
        %v628 = vunpack.c.l.b16 %v456
        %v629 = vunpack.c.h.b16 %v456
        %v630 = vunpack.c.l.b16 %v457
        %v631 = vunpack.c.h.b16 %v457
        %v632 = vunpack.c.l.b16 %v458
        %v633 = vunpack.c.h.b16 %v458
        %v634 = vunpack.c.l.b16 %v459
        %v635 = vunpack.c.h.b16 %v459
        %v636 = vunpack.c.l.b16 %v460
        %v637 = vunpack.c.h.b16 %v460
        %v638 = vunpack.c.l.b16 %v461
        %v639 = vunpack.c.h.b16 %v461
        %v640 = vunpack.c.l.b16 %v462
        %v641 = vunpack.c.h.b16 %v462
        %v642 = vunpack.c.l.b16 %v463
        %v643 = vunpack.c.h.b16 %v463
        %v644 = vunpack.c.l.b16 %v464
        %v645 = vunpack.c.h.b16 %v464
        %v646 = vunpack.c.l.b16 %v465
        %v647 = vunpack.c.h.b16 %v465
        %v648 = vunpack.c.l.b16 %v466
        %v649 = vunpack.c.h.b16 %v466
        %v650 = vunpack.c.l.b16 %v467
        %v651 = vunpack.c.h.b16 %v467
        %v652 = vunpack.c.l.b16 %v468
        %v653 = vunpack.c.h.b16 %v468
        %v654 = vunpack.c.l.b16 %v469
        %v655 = vunpack.c.h.b16 %v469
        %v656 = vunpack.c.l.b16 %v470
        %v657 = vunpack.c.h.b16 %v470
        %v658 = vunpack.c.l.b16 %v471
        %v659 = vunpack.c.h.b16 %v471
        %v660 = vunpack.c.l.b16 %v472
        %v661 = vunpack.c.h.b16 %v472
        %v662 = vunpack.c.l.b16 %v473
        %v663 = vunpack.c.h.b16 %v473
        %v664 = vunpack.c.l.b16 %v474
        %v665 = vunpack.c.h.b16 %v474
        %v666 = vunpack.c.l.b16 %v475
        %v667 = vunpack.c.h.b16 %v475
        %v668 = vunpack.c.l.b16 %v476
        %v669 = vunpack.c.h.b16 %v476
        %v670 = vunpack.c.l.b16 %v477
        %v671 = vunpack.c.h.b16 %v477
        %v672 = vunpack.c.l.b16 %v478
        %v673 = vunpack.c.h.b16 %v478
        %v674 = vunpack.c.l.b16 %v479
        %v675 = vunpack.c.h.b16 %v479
        %v676 = vunpack.c.l.b16 %v480
        %v677 = vunpack.c.h.b16 %v480
        %v678 = vunpack.c.l.b16 %v481
        %v679 = vunpack.c.h.b16 %v481
        %v680 = vunpack.c.l.b16 %v482
        %v681 = vunpack.c.h.b16 %v482
        %v682 = vunpack.c.l.b16 %v483
        %v683 = vunpack.c.h.b16 %v483
        %v684 = vunpack.c.l.b16 %v484
        %v685 = vunpack.c.h.b16 %v484
        %v686 = vunpack.c.l.b16 %v485
        %v687 = vunpack.c.h.b16 %v485
        %v688 = vunpack.c.l.b16 %v486
        %v689 = vunpack.c.h.b16 %v486
        %v690 = vunpack.c.l.b16 %v487
        %v691 = vunpack.c.h.b16 %v487
        %v692 = vpack.c.b16 %v566, %v564
        %v693 = vpack.c.b16 %v567, %v565
        %v694 = vpack.c.b16 %v570, %v568
        %v695 = vpack.c.b16 %v571, %v569
        %v696 = vpack.c.b16 %v574, %v572
        %v697 = vpack.c.b16 %v575, %v573
        %v698 = vpack.c.b16 %v578, %v576
        %v699 = vpack.c.b16 %v579, %v577
        %v700 = vpack.c.b16 %v582, %v580
        %v701 = vpack.c.b16 %v583, %v581
        %v702 = vpack.c.b16 %v586, %v584
        %v703 = vpack.c.b16 %v587, %v585
        %v704 = vpack.c.b16 %v590, %v588
        %v705 = vpack.c.b16 %v591, %v589
        %v706 = vpack.c.b16 %v594, %v592
        %v707 = vpack.c.b16 %v595, %v593
        %v708 = vpack.c.b16 %v598, %v596
        %v709 = vpack.c.b16 %v599, %v597
        %v710 = vpack.c.b16 %v602, %v600
        %v711 = vpack.c.b16 %v603, %v601
        %v712 = vpack.c.b16 %v606, %v604
        %v713 = vpack.c.b16 %v607, %v605
        %v714 = vpack.c.b16 %v610, %v608
        %v715 = vpack.c.b16 %v611, %v609
        %v716 = vpack.c.b16 %v614, %v612
        %v717 = vpack.c.b16 %v615, %v613
        %v718 = vpack.c.b16 %v618, %v616
        %v719 = vpack.c.b16 %v619, %v617
        %v720 = vpack.c.b16 %v622, %v620
        %v721 = vpack.c.b16 %v623, %v621
        %v722 = vpack.c.b16 %v626, %v624
        %v723 = vpack.c.b16 %v627, %v625
        %v724 = vpack.c.b16 %v630, %v628
        %v725 = vpack.c.b16 %v631, %v629
        %v726 = vpack.c.b16 %v634, %v632
        %v727 = vpack.c.b16 %v635, %v633
        %v728 = vpack.c.b16 %v638, %v636
        %v729 = vpack.c.b16 %v639, %v637
        %v730 = vpack.c.b16 %v642, %v640
        %v731 = vpack.c.b16 %v643, %v641
        %v732 = vpack.c.b16 %v646, %v644
        %v733 = vpack.c.b16 %v647, %v645
        %v734 = vpack.c.b16 %v650, %v648
        %v735 = vpack.c.b16 %v651, %v649
        %v736 = vpack.c.b16 %v654, %v652
        %v737 = vpack.c.b16 %v655, %v653
        %v738 = vpack.c.b16 %v658, %v656
        %v739 = vpack.c.b16 %v659, %v657
        %v740 = vpack.c.b16 %v662, %v660
        %v741 = vpack.c.b16 %v663, %v661
        %v742 = vpack.c.b16 %v666, %v664
        %v743 = vpack.c.b16 %v667, %v665
        %v744 = vpack.c.b16 %v670, %v668
        %v745 = vpack.c.b16 %v671, %v669
        %v746 = vpack.c.b16 %v674, %v672
        %v747 = vpack.c.b16 %v675, %v673
        %v748 = vpack.c.b16 %v678, %v676
        %v749 = vpack.c.b16 %v679, %v677
        %v750 = vpack.c.b16 %v682, %v680
        %v751 = vpack.c.b16 %v683, %v681
        %v752 = vpack.c.b16 %v686, %v684
        %v753 = vpack.c.b16 %v687, %v685
        %v754 = vpack.c.b16 %v690, %v688
        %v755 = vpack.c.b16 %v691, %v689
        %820 = vmatprep.subr.bf16.mxu0 %v707
        %821 = vmatpush1.bf16.msra.mxu0 %v706
        %822 = vmatprep.subr.bf16.mxu0 %v705
        %823 = vmatpush1.bf16.msra.mxu0 %v704
        %824 = vmatprep.subr.bf16.mxu0 %v703
        %825 = vmatpush1.bf16.msra.mxu0 %v702
        %826 = vmatprep.subr.bf16.mxu0 %v701
        %827 = vmatpush1.bf16.msra.mxu0 %v700
        %828 = vmatprep.subr.bf16.mxu0 %v699
        %829 = vmatpush1.bf16.msra.mxu0 %v698
        %830 = vmatprep.subr.bf16.mxu0 %v697
        %831 = vmatpush1.bf16.msra.mxu0 %v696
        %832 = vmatprep.subr.bf16.mxu0 %v695
        %833 = vmatpush1.bf16.msra.mxu0 %v694
        %834 = vmatprep.subr.bf16.mxu0 %v693
        %835 = vmatpush1.bf16.msra.mxu0 %v692
        %836 = vmatprep.subr.bf16.mxu0 %v723
        %837 = vmatpush2.bf16.msra.mxu0 %v722
        %838 = vmatprep.subr.bf16.mxu0 %v721
        %839 = vmatpush2.bf16.msra.mxu0 %v720
        %840 = vmatprep.subr.bf16.mxu0 %v719
        %841 = vmatpush2.bf16.msra.mxu0 %v718
        %842 = vmatprep.subr.bf16.mxu0 %v717
        %843 = vmatpush2.bf16.msra.mxu0 %v716
        %844 = vmatprep.subr.bf16.mxu0 %v715
        %845 = vmatpush2.bf16.msra.mxu0 %v714
        %846 = vmatprep.subr.bf16.mxu0 %v713
        %847 = vmatpush2.bf16.msra.mxu0 %v712
        %848 = vmatprep.subr.bf16.mxu0 %v711
        %849 = vmatpush2.bf16.msra.mxu0 %v710
        %850 = vmatprep.subr.bf16.mxu0 %v709
        %851 = vmatpush2.bf16.msra.mxu0 %v708
        %852 = vmatprep.mubr.bf16.mxu0 %v421
        %853 = vmatmul.mubr.bf16.gmra.mxu0 %v420
        %v854 = vpop.f32.mrf.mxu0
        %v855 = vadd.f32 %v493, %v854
        %v856 = vpop.f32.mrf.mxu0
        %v857 = vadd.f32 %v497, %v856
        %v858 = vpop.f32.mrf.mxu0
        %v859 = vpop.f32.mrf.mxu0
        %860 = vdwg.mxu0
        %861 = vmatprep.subr.bf16.mxu0 %v739
        %862 = vmatpush1.bf16.msra.mxu0 %v738
        %863 = vmatprep.subr.bf16.mxu0 %v737
        %864 = vmatpush1.bf16.msra.mxu0 %v736
        %865 = vmatprep.subr.bf16.mxu0 %v735
        %866 = vmatpush1.bf16.msra.mxu0 %v734
        %867 = vmatprep.subr.bf16.mxu0 %v733
        %868 = vmatpush1.bf16.msra.mxu0 %v732
        %869 = vmatprep.subr.bf16.mxu0 %v731
        %870 = vmatpush1.bf16.msra.mxu0 %v730
        %871 = vmatprep.subr.bf16.mxu0 %v729
        %872 = vmatpush1.bf16.msra.mxu0 %v728
        %873 = vmatprep.subr.bf16.mxu0 %v727
        %874 = vmatpush1.bf16.msra.mxu0 %v726
        %875 = vmatprep.subr.bf16.mxu0 %v725
        %876 = vmatpush1.bf16.msra.mxu0 %v724
        %877 = vmatprep.subr.bf16.mxu0 %v755
        %878 = vmatpush2.bf16.msra.mxu0 %v754
        %879 = vmatprep.subr.bf16.mxu0 %v753
        %880 = vmatpush2.bf16.msra.mxu0 %v752
        %881 = vmatprep.subr.bf16.mxu0 %v751
        %882 = vmatpush2.bf16.msra.mxu0 %v750
        %883 = vmatprep.subr.bf16.mxu0 %v749
        %884 = vmatpush2.bf16.msra.mxu0 %v748
        %885 = vmatprep.subr.bf16.mxu0 %v747
        %886 = vmatpush2.bf16.msra.mxu0 %v746
        %887 = vmatprep.subr.bf16.mxu0 %v745
        %888 = vmatpush2.bf16.msra.mxu0 %v744
        %889 = vmatprep.subr.bf16.mxu0 %v743
        %890 = vmatpush2.bf16.msra.mxu0 %v742
        %891 = vmatprep.subr.bf16.mxu0 %v741
        %892 = vmatpush2.bf16.msra.mxu0 %v740
        %893 = vmatprep.mubr.bf16.mxu0 %v423
        %894 = vmatmul.mubr.bf16.gmra.mxu0 %v422
        %v895 = vpop.f32.mrf.mxu0
        %v896 = vadd.f32 %v855, %v895
        %v897 = vpop.f32.mrf.mxu0
        %v898 = vadd.f32 %v857, %v897
        %v899 = vpop.f32.mrf.mxu0
        %v900 = vpop.f32.mrf.mxu0
        %901 = vdwg.mxu0
        %v902 = vxor.u32 %v896, 2147483648
        %v903 = vxor.u32 %v898, 2147483648
        %v904 = vmul.f32 %v902, 1.442695
        %v905 = vpow.pop %v904
        %v906 = vmul.f32 %v903, 1.442695
        %v907 = vpow.pop %v906
        %v908 = vadd.f32 %v905, 1.0
        %v909 = vadd.f32 %v907, 1.0
        %v910 = vrcp.pop %v908
        %v911 = vmul.f32 1.0, %v910
        %v912 = vrcp.pop %v909
        %v913 = vmul.f32 1.0, %v912
        %914 = vst [vmem:[%s281] sm:$0xff] %v911
        %915 = vst [vmem:[%s281 + $0x8] sm:$0xff] %v913
        %s916 = sand.u32 %s142, 1
        %s917 = scalar_lea.sflag [#allocation4], %s916
        %s918 = sand.u32 %s142, 1
        %s919 = smul.addr %s918, 16
        %s920 = scalar_lea.vmem [#allocation10], %s919
        // Predicated region
        $region57: #{tpu_custom_call.1} parent=39 // pred_check
          %p921 = pneg %p152
        $region58: #{tpu_custom_call.1} parent=39 // pred_check_branch
          %923 = sbr.rel (%p921) target = $region60
        $region59: #{tpu_custom_call.1} parent=39 // pred_region
          %s925 = ssub.s32 256, 256
          %926 = vsyncadd %s917, %s925
          %s927 = smul.addr %s24, 2
          %s928 = smul.addr %s927, 128
          %s929 = scalar_lea.hbm %s5, %s928
          %s931 = sshll.u32 %s920, 4
          %s932 = int_to_ptr.vmem [resolvable:$true] %s931
          %934 = dma.vmem_to_hbm [thread:$0]  %s932, 256, %s929, %s917
        $region60: #{tpu_custom_call.1} parent=39 // pred_fallthru
          _
      $region40: #{tpu_custom_call.1} parent=5 // pred_fallthru
        _
      %p935 = scmp.le.s32.totalorder 2, %s19
      // Predicated region
      $region61: #{tpu_custom_call.1} parent=5 // pred_check
        %p936 = pneg %p935
      $region62: #{tpu_custom_call.1} parent=5 // pred_check_branch
        %938 = sbr.rel (%p936) target = $region64
      $region63: #{tpu_custom_call.1} parent=5 // pred_region
        %s939 = ssub.s32 %s19, 2
        // Predicated region
        $region65: #{tpu_custom_call.1} parent=63 // pred_check
          %p940 = pneg %p158
        $region66: #{tpu_custom_call.1} parent=63 // pred_check_branch
          %942 = sbr.rel (%p940) target = $region68
        $region67: #{tpu_custom_call.1} parent=63 // pred_region
          %s943 = sand.u32 %s143, 1
          %s944 = scalar_lea.sflag [#allocation4], %s943
          %s945 = sand.u32 %s143, 1
          %s946 = smul.addr %s945, 16
          %s947 = scalar_lea.vmem [#allocation10], %s946
          %948 = dma.done %s944, 256
        $region68: #{tpu_custom_call.1} parent=63 // pred_fallthru
          _
      $region64: #{tpu_custom_call.1} parent=5 // pred_fallthru
        _
    $region6: #{tpu_custom_call.1} parent=1 // loop_footer
      %s23 = sadd.s32 1, %s19
    $region7: #{tpu_custom_call.1} parent=1 // loop_footer_branch
      %18 = sbr.rel target = $region3
    $region8: #{tpu_custom_call.1} parent=1 // loop_exit
      _
    %949 = vsyncpa [#allocation3], 1
    %s950 = scalar_lea.sflag [#allocation3], 1
    %951 = vsyncpa %s950, 1
    %952 = vsyncpa [#allocation6], 1
    %953 = vsyncpa [#allocation9], 1
    %954 = vsyncpa [#allocation4], 1
    %s955 = scalar_lea.sflag [#allocation4], 1
    %956 = vsyncpa %s955, 1

</llo_original>
